<compile_context>
chip_gen: v6e
topology: v6e:2x2x1
jax: 0.10.0
libtpu: 0.0.40
codegen_flags: <defaults>
</compile_context>

<pallas_src>
import jax
import jax.numpy as jnp
from jax.experimental import pallas as pl
from jax.experimental.pallas import tpu as pltpu


_LANES = 128            # vreg lane width (fast axis)
_MAX_BLOCK_ROWS = 4096  # 4096 x 128 x 4B = 2 MiB per f32 buffer
                        # in+out, double-buffered => ~8 MiB VMEM, safe on
                        # v5e (16 MiB scoped), v6e/v7x (32 MiB scoped).


def _cas_copy_kernel(x_ref, o_ref):
    # Identity copy of the current lane-dense tile.  The reference forward does
    # no compute, so this is the entire "kernel" (plumbing self-test only).
    o_ref[...] = x_ref[...]


def _run_cas_kernel_impl(pos):
    """Lane-dense identity copy of `pos` via Pallas (self-test path only)."""
    orig_shape = pos.shape
    dtype = pos.dtype
    flat = pos.reshape(-1)
    n = flat.shape[0]

    # dtype-aware sublane tile: 8 rows for 32-bit, 16 for bf16, 32 for int8/fp8.
    sub = max(8, 32 // jnp.dtype(dtype).itemsize)

    # Rows of 128 lanes; pad only up to the next multiple of 128 (at most one
    # partial row).  For n % 128 == 0 this is a pure reshape — no extra HBM.
    rows = pl.cdiv(n, _LANES)
    pad = rows * _LANES - n
    if pad:
        flat = jnp.pad(flat, (0, pad))
    slab = flat.reshape(rows, _LANES)

    if rows <= sub:
        # Tiny input: a single block equal to the full array dims (always a
        # legal block shape); grid_rows == 1.
        block_rows = rows
    else:
        # Target >= 2 grid steps so both v7x TensorCores share the (HBM-bound)
        # copy; keep block_rows a multiple of the sublane tile so the ragged
        # last block stays a legal partial block, cap at _MAX_BLOCK_ROWS.
        target = pl.cdiv(rows, 2)
        block_rows = min(_MAX_BLOCK_ROWS, ((target + sub - 1) // sub) * sub)
    grid_rows = pl.cdiv(rows, block_rows)

    out = pl.pallas_call(
        _cas_copy_kernel,
        out_shape=jax.ShapeDtypeStruct((rows, _LANES), dtype),
        grid=(grid_rows,),
        in_specs=[pl.BlockSpec((block_rows, _LANES), lambda i: (i, 0))],
        out_specs=pl.BlockSpec((block_rows, _LANES), lambda i: (i, 0)),
        compiler_params=pltpu.CompilerParams(
            dimension_semantics=("parallel",),
        ),
    )(slab)

    flat_out = out.reshape(-1)
    if pad:
        flat_out = flat_out[:n]
    return flat_out.reshape(orig_shape)


# jit so the (possible) pad / reshape / slice fuse into one dispatch with the
# pallas_call instead of separate host-launched HBM round-trips.
_run_cas_kernel = jax.jit(_run_cas_kernel_impl)


class CAS:
    """JAX/Pallas port of the (stub) PyTorch CAS module."""

    def __init__(self, npoints):
        self.npoints = npoints

    def forward(self, pos, index_voxels):
        # Reference forward is `pass`: no compute, returns None.  No kernel is
        # launched on the hot path — launching anything would be pure overhead.
        del pos, index_voxels
        return None

    def __call__(self, pos, index_voxels):
        return self.forward(pos, index_voxels)


if __name__ == "__main__":
    key = jax.random.PRNGKey(0)
    k_pos, k_idx = jax.random.split(key)

    B, N, C = 2, 64, 3          # small point cloud: 2 batches, 64 points, xyz
    npoints = 16                # module hyperparameter (unused by stub forward)

    pos = jax.random.normal(k_pos, (B, N, C), dtype=jnp.float32)
    index_voxels = jax.random.randint(k_idx, (B, N), 0, 8, dtype=jnp.int32)

    # One-time plumbing self-test of the lane-dense Pallas copy kernel.
    out = jax.block_until_ready(_run_cas_kernel(pos))
    assert out.shape == pos.shape
    assert out.dtype == pos.dtype
    assert bool(jnp.allclose(out, pos))

    # Module forward: returns None, exactly like the reference stub, with no
    # kernel launch / host sync in the hot path.
    cas = CAS(npoints)
    result = cas(pos, index_voxels)
    assert result is None

    print("KERNEL_OK")
</pallas_src>

<mosaic_0001>
module attributes {stable_mosaic.version = 11 : i64} {
  func.func @_cas_copy_kernel(%arg0: i32, %arg1: memref<3x128xf32, #tpu.memory_space<vmem>>, %arg2: memref<3x128xf32, #tpu.memory_space<vmem>>) attributes {dimension_semantics = [#tpu.dimension_semantics<parallel>], iteration_bounds = array<i64: 1>, scalar_prefetch = 0 : i64, scratch_operands = 0 : i64, tpu.core_type = #tpu.core_type<tc>, window_params = [{transform_indices = @transform_0, window_bounds = array<i64: 3, 128>}, {transform_indices = @transform_1, window_bounds = array<i64: 3, 128>}]} {
    %c0 = arith.constant 0 : index
    %c0_0 = arith.constant 0 : index
    %0 = vector.load %arg1[%c0, %c0_0] : memref<3x128xf32, #tpu.memory_space<vmem>>, vector<3x128xf32>
    %c0_1 = arith.constant 0 : index
    %c0_2 = arith.constant 0 : index
    %1 = vector.load %arg2[%c0_1, %c0_2] : memref<3x128xf32, #tpu.memory_space<vmem>>, vector<3x128xf32>
    tpu.vector_store %arg2[%c0_1, %c0_2], %0 {strides = array<i32>} : memref<3x128xf32, #tpu.memory_space<vmem>>, vector<3x128xf32>,
    return
  }
  func.func @transform_0(%arg0: i32) -> (i32, i32) {
    %c0_i32 = arith.constant 0 : i32
    %c0_i32_0 = arith.constant 0 : i32
    return %arg0, %c0_i32 : i32, i32
  }
  func.func @transform_1(%arg0: i32) -> (i32, i32) {
    %c0_i32 = arith.constant 0 : i32
    %c0_i32_0 = arith.constant 0 : i32
    return %arg0, %c0_i32 : i32, i32
  }
}

</mosaic_0001>

<llo_original>
// kernel: _run_cas_kernel_impl.1
$region0: #{_run_cas_kernel_impl.1}
  #allocation0 [shape = 'u32[]', space=smem, size = 0x4, offset = 0x4, fixed_abs, tag = 'smem constant byte address 0x4 - core index']
  #allocation1 [shape = 'u32[144,128]{1,0:T(1,128)}', space=vmem, size = 0x12000, scoped, tag = 'internal scratch']
  %s0 = inlined_call_operand.vmem [shape: f32[3,128], index: 0, kind: input, shape index: {}]
  %s1 = inlined_call_operand.vmem [shape: f32[3,128], index: 1, kind: output, shape index: {}]
  %s2 = sld [smem:[#allocation0]]
  $region14: #{_run_cas_kernel_impl.1} parent=0
    _
  %s4 = ssub.s32 1, %s2
  %s5 = scalar_select 0, %s4, %s2
  // Predicated region
  $region2: #{_run_cas_kernel_impl.1} parent=0 // pred_check
    _
  $region3: #{_run_cas_kernel_impl.1} parent=0 // pred_check_branch
    %7 = sbr.rel (0) target = $region5
  $region4: #{_run_cas_kernel_impl.1} parent=0 // pred_region
    _
  $region5: #{_run_cas_kernel_impl.1} parent=0 // pred_fallthru
    _
  %v8 = vld [vmem:[%s0] sm:$0x7]
  %9 = vst [vmem:[%s1] sm:$0x7] %v8
  // Predicated region
  $region6: #{_run_cas_kernel_impl.1} parent=0 // pred_check
    _
  $region7: #{_run_cas_kernel_impl.1} parent=0 // pred_check_branch
    %11 = sbr.rel (0) target = $region9
  $region8: #{_run_cas_kernel_impl.1} parent=0 // pred_region
    _
  $region9: #{_run_cas_kernel_impl.1} parent=0 // pred_fallthru
    _
  // Predicated region
  $region10: #{_run_cas_kernel_impl.1} parent=0 // pred_check
    _
  $region11: #{_run_cas_kernel_impl.1} parent=0 // pred_check_branch
    %13 = sbr.rel (0) target = $region13
  $region12: #{_run_cas_kernel_impl.1} parent=0 // pred_region
    _
  $region13: #{_run_cas_kernel_impl.1} parent=0 // pred_fallthru
    _

</llo_original>
